<compile_context>
chip_gen: v5e
topology: v5e:2x2
jax: 0.10.0
libtpu: 0.0.40
codegen_flags: <defaults>
</compile_context>

<pallas_src>
import functools
import math

import jax
import jax.numpy as jnp
from jax import lax
from jax.experimental import pallas as pl
from jax.experimental.pallas import tpu as pltpu


def _mha_kernel(xt_ref, mask_ref, wqkv_ref, bqkv_ref, wz_ref, bz_ref, out_ref,
                *, nheads, nh):
    """One grid step == one batch element.

    xt_ref:   (1, D, S)      bf16  x transposed (feature-major)
    mask_ref: (1, S, S)      f32   additive attention mask, [query, key]
    wqkv_ref: (3*H*nh, D)    bf16  fused [Wq*scale; Wk; Wv], torch (out, in) orientation
    bqkv_ref: (3*H*nh, 1)    f32   fused bias (Q part pre-scaled)
    wz_ref:   (D, H*nh)      bf16  output projection, (out, in) orientation
    bz_ref:   (D, 1)         f32
    out_ref:  (1, S, D)
    """
    H = nheads
    D, S = xt_ref.shape[1], xt_ref.shape[2]

    xt = xt_ref[0]                       # (D, S) bf16
    mask = mask_ref[0]                   # (S, S) f32

    # --- Fused Q/K/V projection: one (3HD, D) @ (D, S) MXU op, f32 accumulation. ---
    qkv = jnp.dot(wqkv_ref[...], xt, preferred_element_type=jnp.float32)
    qkv = qkv + bqkv_ref[...]            # (3HD, S) f32
    # Head-batched view; the minor (lane) dim stays S, so this reshape is relayout-free.
    qkv = qkv.reshape(3 * H, nh, S)

    q = jnp.swapaxes(qkv[:H], 1, 2).astype(jnp.bfloat16)       # (H, S, nh)
    k = qkv[H:2 * H].astype(jnp.bfloat16)                       # (H, nh, S)
    v = qkv[2 * H:].astype(jnp.bfloat16)                        # (H, nh, S)

    # --- Scores: batched over heads, contracting nh directly (no K^T materialized). ---
    s = lax.dot_general(q, k, (((2,), (1,)), ((0,), (0,))),
                        preferred_element_type=jnp.float32)     # (H, S, S)
    s = s + mask[None]

    # --- Numerically-stable softmax in f32; the divide runs on the EUP. ---
    s = s - jnp.max(s, axis=-1, keepdims=True)
    p = jnp.exp(s)
    p = p * pl.reciprocal(jnp.sum(p, axis=-1, keepdims=True), approx=True)
    # TODO(synk): attention-prob dropout is identity in eval mode; omitted.

    # --- Context, batched over heads: Z^T[h] = V^T[h] @ P[h]^T -> (H, nh, S). ---
    zt = lax.dot_general(v, p.astype(jnp.bfloat16),
                         (((2,), (2,)), ((0,), (0,))),
                         preferred_element_type=jnp.float32)    # (H, nh, S)

    # --- Merge heads (leading-dim reshape only) and apply the output projection. ---
    zt = zt.reshape(H * nh, S).astype(jnp.bfloat16)             # (HD, S)
    out_t = jnp.dot(wz_ref[...], zt, preferred_element_type=jnp.float32)
    out_t = out_t + bz_ref[...]                                 # (D, S) f32
    out_ref[0] = out_t.T.astype(out_ref.dtype)                  # (S, D)


def self_attention_pallas(x, attnmask, params, *, nheads, nh):
    """x: (B, S, D=nh); attnmask: (B or 1, 1, S, S) additive mask; returns (B, S, D)."""
    B, S, D = x.shape
    assert D == nh
    HD = nheads * nh
    scale = 1.0 / math.sqrt(nh)

    # Fused QKV weight/bias in torch (out_features, in_features) orientation with the
    # 1/sqrt(nh) score scale folded into the Q rows. Weights bf16, biases f32.
    wqkv_t = jnp.concatenate(
        [params["wq"] * scale, params["wk"], params["wv"]], axis=1).T.astype(jnp.bfloat16)  # (3HD, D)
    bqkv_t = jnp.concatenate(
        [params["bq"] * scale, params["bk"], params["bv"]], axis=1).T.astype(jnp.float32)   # (3HD, 1)
    wz_t = params["wz"].T.astype(jnp.bfloat16)      # (D, HD)
    bz_t = params["bz"].T.astype(jnp.float32)       # (D, 1)

    # Feature-major activations so in-kernel head split/merge never touches the lane dim.
    xt = jnp.swapaxes(x, 1, 2).astype(jnp.bfloat16)             # (B, D, S)

    # Drop the singleton head dim before the DMA. Batch-shared masks are fetched once.
    mask = attnmask.reshape(attnmask.shape[0], S, S).astype(jnp.float32)
    mask_index_map = ((lambda b: (0, 0, 0)) if mask.shape[0] == 1
                      else (lambda b: (b, 0, 0)))

    kernel = functools.partial(_mha_kernel, nheads=nheads, nh=nh)
    const = lambda shape: pl.BlockSpec(shape, lambda b: (0, 0))  # resident weight blocks

    return pl.pallas_call(
        kernel,
        out_shape=jax.ShapeDtypeStruct((B, S, D), x.dtype),
        grid_spec=pltpu.PrefetchScalarGridSpec(
            num_scalar_prefetch=0,
            grid=(B,),
            in_specs=[
                pl.BlockSpec((1, D, S), lambda b: (b, 0, 0)),   # x^T
                pl.BlockSpec((1, S, S), mask_index_map),        # additive mask
                const((3 * HD, D)),                             # fused W_qkv
                const((3 * HD, 1)),                             # fused b_qkv
                const((D, HD)),                                 # W_z
                const((D, 1)),                                  # b_z
            ],
            out_specs=pl.BlockSpec((1, S, D), lambda b: (b, 0, 0)),
        ),
        compiler_params=pltpu.CompilerParams(
            dimension_semantics=("parallel",)),
    )(xt, mask, wqkv_t, bqkv_t, wz_t, bz_t)


def self_attention_ref(x, attnmask, params, *, nheads, nh):
    """Pure-JAX f32 reference mirroring the PyTorch forward (eval mode)."""
    B, S, D = x.shape
    q = x @ params["wq"] + params["bq"][0]
    k = x @ params["wk"] + params["bk"][0]
    v = x @ params["wv"] + params["bv"][0]

    def split_heads(t):  # (B, S, H*nh) -> (B, H, S, nh)
        return t.reshape(B, S, nheads, nh).transpose(0, 2, 1, 3)

    q, k, v = split_heads(q), split_heads(k), split_heads(v)
    s = jnp.einsum("bhqd,bhkd->bhqk", q, k) / math.sqrt(nh)
    s = s + attnmask
    p = jax.nn.softmax(s, axis=-1)
    z = jnp.einsum("bhqk,bhkd->bhqd", p, v)
    z = z.transpose(0, 2, 1, 3).reshape(B, S, nheads * nh)
    return z @ params["wz"] + params["bz"][0]


def init_params(key, nh, nheads):
    HD = nheads * nh
    ks = jax.random.split(key, 8)

    def u(k, shape, fan_in):
        bound = 1.0 / math.sqrt(fan_in)
        return jax.random.uniform(k, shape, jnp.float32, -bound, bound)

    return {
        "wq": u(ks[0], (nh, HD), nh), "bq": u(ks[1], (1, HD), nh),
        "wk": u(ks[2], (nh, HD), nh), "bk": u(ks[3], (1, HD), nh),
        "wv": u(ks[4], (nh, HD), nh), "bv": u(ks[5], (1, HD), nh),
        "wz": u(ks[6], (HD, nh), HD), "bz": u(ks[7], (1, nh), HD),
    }


if __name__ == "__main__":
    B, S, NH, NHEADS = 2, 8, 32, 4

    key = jax.random.PRNGKey(0)
    kx, kp = jax.random.split(key)
    x = jax.random.normal(kx, (B, S, NH), dtype=jnp.float32)

    # Additive causal attention mask, shape (B, 1, S, S) as in the module spec.
    causal = jnp.tril(jnp.ones((S, S), dtype=jnp.float32))
    attnmask = jnp.where(causal > 0, 0.0, -1e9).astype(jnp.float32)
    attnmask = jnp.broadcast_to(attnmask, (B, 1, S, S))

    params = init_params(kp, NH, NHEADS)

    out = self_attention_pallas(x, attnmask, params, nheads=NHEADS, nh=NH)
    out = jax.block_until_ready(out)

    ref = self_attention_ref(x, attnmask, params, nheads=NHEADS, nh=NH)
    assert out.shape == (B, S, NH)
    # Tolerance reflects bf16 MXU operands (f32 accumulation) vs the pure-f32 reference.
    assert jnp.allclose(out, ref, atol=2e-2, rtol=2e-2), "mismatch vs reference"

    print("KERNEL_OK")
</pallas_src>

<mosaic_0001>
module attributes {stable_mosaic.version = 11 : i64} {
  func.func @_mha_kernel(%arg0: i32, %arg1: memref<1x32x8xbf16, #tpu.memory_space<vmem>>, %arg2: memref<1x8x8xf32, #tpu.memory_space<vmem>>, %arg3: memref<384x32xbf16, #tpu.memory_space<vmem>>, %arg4: memref<384x1xf32, #tpu.memory_space<vmem>>, %arg5: memref<32x128xbf16, #tpu.memory_space<vmem>>, %arg6: memref<32x1xf32, #tpu.memory_space<vmem>>, %arg7: memref<1x8x32xf32, #tpu.memory_space<vmem>>) attributes {dimension_semantics = [#tpu.dimension_semantics<parallel>], iteration_bounds = array<i64: 2>, scalar_prefetch = 0 : i64, scratch_operands = 0 : i64, tpu.core_type = #tpu.core_type<tc>, window_params = [{transform_indices = @transform_0, window_bounds = array<i64: 1, 32, 8>}, {transform_indices = @transform_1, window_bounds = array<i64: 1, 8, 8>}, {pipeline_mode = #tpu.pipeline_mode<synchronous>, transform_indices = @transform_2, window_bounds = array<i64: 384, 32>}, {pipeline_mode = #tpu.pipeline_mode<synchronous>, transform_indices = @transform_3, window_bounds = array<i64: 384, 1>}, {pipeline_mode = #tpu.pipeline_mode<synchronous>, transform_indices = @transform_4, window_bounds = array<i64: 32, 128>}, {pipeline_mode = #tpu.pipeline_mode<synchronous>, transform_indices = @transform_5, window_bounds = array<i64: 32, 1>}, {transform_indices = @transform_6, window_bounds = array<i64: 1, 8, 32>}]} {
    %c0 = arith.constant 0 : index
    %c0_0 = arith.constant 0 : index
    %c0_1 = arith.constant 0 : index
    %0 = vector.load %arg1[%c0, %c0_0, %c0_1] : memref<1x32x8xbf16, #tpu.memory_space<vmem>>, vector<1x32x8xbf16>
    %1 = vector.shape_cast %0 : vector<1x32x8xbf16> to vector<32x8xbf16>
    %c0_2 = arith.constant 0 : index
    %c0_3 = arith.constant 0 : index
    %c0_4 = arith.constant 0 : index
    %2 = vector.load %arg2[%c0_2, %c0_3, %c0_4] : memref<1x8x8xf32, #tpu.memory_space<vmem>>, vector<1x8x8xf32>
    %3 = vector.shape_cast %2 : vector<1x8x8xf32> to vector<8x8xf32>
    %c0_5 = arith.constant 0 : index
    %c0_6 = arith.constant 0 : index
    %4 = vector.load %arg3[%c0_5, %c0_6] : memref<384x32xbf16, #tpu.memory_space<vmem>>, vector<384x32xbf16>
    %cst = arith.constant dense<0.000000e+00> : vector<384x8xf32>
    %5 = tpu.matmul %4, %1, %cst {dimension_numbers = #tpu.dot_dimension_numbers<[1], [0], [0], [1], [0, 0, 1, 1], [], []>} : vector<384x32xbf16>, vector<32x8xbf16>, vector<384x8xf32> -> vector<384x8xf32>
    %c0_7 = arith.constant 0 : index
    %c0_8 = arith.constant 0 : index
    %6 = vector.load %arg4[%c0_7, %c0_8] : memref<384x1xf32, #tpu.memory_space<vmem>>, vector<384x1xf32>
    %7 = vector.broadcast %6 : vector<384x1xf32> to vector<384x8xf32>
    %8 = arith.addf %5, %7 : vector<384x8xf32>
    %9 = vector.shape_cast %8 : vector<384x8xf32> to vector<12x32x8xf32>
    %10 = vector.extract_strided_slice %9 {offsets = [0, 0, 0], sizes = [4, 32, 8], strides = [1, 1, 1]} : vector<12x32x8xf32> to vector<4x32x8xf32>
    %11 = tpu.transpose %10, [0, 2, 1] : vector<4x32x8xf32> -> vector<4x8x32xf32>
    %12 = arith.truncf %11 : vector<4x8x32xf32> to vector<4x8x32xbf16>
    %13 = vector.extract_strided_slice %9 {offsets = [4, 0, 0], sizes = [4, 32, 8], strides = [1, 1, 1]} : vector<12x32x8xf32> to vector<4x32x8xf32>
    %14 = arith.truncf %13 : vector<4x32x8xf32> to vector<4x32x8xbf16>
    %15 = vector.extract_strided_slice %9 {offsets = [8, 0, 0], sizes = [4, 32, 8], strides = [1, 1, 1]} : vector<12x32x8xf32> to vector<4x32x8xf32>
    %16 = arith.truncf %15 : vector<4x32x8xf32> to vector<4x32x8xbf16>
    %cst_9 = arith.constant dense<0.000000e+00> : vector<4x8x8xf32>
    %17 = tpu.matmul %12, %14, %cst_9 {dimension_numbers = #tpu.dot_dimension_numbers<[2], [1], [1], [2], [0, 0, 0, 1, 1, 2], [0], [0]>} : vector<4x8x32xbf16>, vector<4x32x8xbf16>, vector<4x8x8xf32> -> vector<4x8x8xf32>
    %18 = vector.shape_cast %3 : vector<8x8xf32> to vector<1x8x8xf32>
    %19 = vector.broadcast %18 : vector<1x8x8xf32> to vector<4x8x8xf32>
    %20 = arith.addf %17, %19 : vector<4x8x8xf32>
    %cst_10 = arith.constant dense<0xFF800000> : vector<4x8xf32>
    %21 = vector.multi_reduction <maximumf>, %20, %cst_10 [2] : vector<4x8x8xf32> to vector<4x8xf32>
    %22 = vector.shape_cast %21 : vector<4x8xf32> to vector<4x8x1xf32>
    %23 = vector.broadcast %22 : vector<4x8x1xf32> to vector<4x8x8xf32>
    %24 = arith.subf %20, %23 : vector<4x8x8xf32>
    %25 = math.exp %24 : vector<4x8x8xf32>
    %cst_11 = arith.constant dense<0.000000e+00> : vector<4x8xf32>
    %26 = vector.multi_reduction <add>, %25, %cst_11 [2] : vector<4x8x8xf32> to vector<4x8xf32>
    %27 = vector.shape_cast %26 : vector<4x8xf32> to vector<4x8x1xf32>
    %28 = tpu.reciprocal %27 {approx = true} : vector<4x8x1xf32> -> vector<4x8x1xf32>
    %29 = vector.broadcast %28 : vector<4x8x1xf32> to vector<4x8x8xf32>
    %30 = arith.mulf %25, %29 : vector<4x8x8xf32>
    %31 = arith.truncf %30 : vector<4x8x8xf32> to vector<4x8x8xbf16>
    %cst_12 = arith.constant dense<0.000000e+00> : vector<4x32x8xf32>
    %32 = tpu.matmul %16, %31, %cst_12 {dimension_numbers = #tpu.dot_dimension_numbers<[2], [2], [1], [1], [0, 0, 0, 1, 1, 1], [0], [0]>} : vector<4x32x8xbf16>, vector<4x8x8xbf16>, vector<4x32x8xf32> -> vector<4x32x8xf32>
    %33 = vector.shape_cast %32 : vector<4x32x8xf32> to vector<128x8xf32>
    %34 = arith.truncf %33 : vector<128x8xf32> to vector<128x8xbf16>
    %c0_13 = arith.constant 0 : index
    %c0_14 = arith.constant 0 : index
    %35 = vector.load %arg5[%c0_13, %c0_14] : memref<32x128xbf16, #tpu.memory_space<vmem>>, vector<32x128xbf16>
    %cst_15 = arith.constant dense<0.000000e+00> : vector<32x8xf32>
    %36 = tpu.matmul %35, %34, %cst_15 {dimension_numbers = #tpu.dot_dimension_numbers<[1], [0], [0], [1], [0, 0, 1, 1], [], []>} : vector<32x128xbf16>, vector<128x8xbf16>, vector<32x8xf32> -> vector<32x8xf32>
    %c0_16 = arith.constant 0 : index
    %c0_17 = arith.constant 0 : index
    %37 = vector.load %arg6[%c0_16, %c0_17] : memref<32x1xf32, #tpu.memory_space<vmem>>, vector<32x1xf32>
    %38 = vector.broadcast %37 : vector<32x1xf32> to vector<32x8xf32>
    %39 = arith.addf %36, %38 : vector<32x8xf32>
    %40 = tpu.transpose %39, [1, 0] : vector<32x8xf32> -> vector<8x32xf32>
    %c0_18 = arith.constant 0 : index
    %c0_19 = arith.constant 0 : index
    %c0_20 = arith.constant 0 : index
    %41 = vector.load %arg7[%c0_18, %c0_19, %c0_20] : memref<1x8x32xf32, #tpu.memory_space<vmem>>, vector<1x8x32xf32>
    %42 = vector.shape_cast %41 : vector<1x8x32xf32> to vector<8x32xf32>
    %43 = vector.shape_cast %40 : vector<8x32xf32> to vector<1x8x32xf32>
    tpu.vector_store %arg7[%c0_18, %c0_19, %c0_20], %43 {strides = array<i32>} : memref<1x8x32xf32, #tpu.memory_space<vmem>>, vector<1x8x32xf32>,
    return
  }
  func.func @transform_0(%arg0: i32) -> (i32, i32, i32) {
    %c0_i32 = arith.constant 0 : i32
    %c0_i32_0 = arith.constant 0 : i32
    %c0_i32_1 = arith.constant 0 : i32
    return %arg0, %c0_i32, %c0_i32_0 : i32, i32, i32
  }
  func.func @transform_1(%arg0: i32) -> (i32, i32, i32) {
    %c0_i32 = arith.constant 0 : i32
    %c0_i32_0 = arith.constant 0 : i32
    %c0_i32_1 = arith.constant 0 : i32
    return %arg0, %c0_i32, %c0_i32_0 : i32, i32, i32
  }
  func.func @transform_2(%arg0: i32) -> (i32, i32) {
    %c0_i32 = arith.constant 0 : i32
    %c0_i32_0 = arith.constant 0 : i32
    %c0_i32_1 = arith.constant 0 : i32
    return %c0_i32, %c0_i32_0 : i32, i32
  }
  func.func @transform_3(%arg0: i32) -> (i32, i32) {
    %c0_i32 = arith.constant 0 : i32
    %c0_i32_0 = arith.constant 0 : i32
    %c0_i32_1 = arith.constant 0 : i32
    return %c0_i32, %c0_i32_0 : i32, i32
  }
  func.func @transform_4(%arg0: i32) -> (i32, i32) {
    %c0_i32 = arith.constant 0 : i32
    %c0_i32_0 = arith.constant 0 : i32
    %c0_i32_1 = arith.constant 0 : i32
    return %c0_i32, %c0_i32_0 : i32, i32
  }
  func.func @transform_5(%arg0: i32) -> (i32, i32) {
    %c0_i32 = arith.constant 0 : i32
    %c0_i32_0 = arith.constant 0 : i32
    %c0_i32_1 = arith.constant 0 : i32
    return %c0_i32, %c0_i32_0 : i32, i32
  }
  func.func @transform_6(%arg0: i32) -> (i32, i32, i32) {
    %c0_i32 = arith.constant 0 : i32
    %c0_i32_0 = arith.constant 0 : i32
    %c0_i32_1 = arith.constant 0 : i32
    return %arg0, %c0_i32, %c0_i32_0 : i32, i32, i32
  }
}

</mosaic_0001>

<llo_original>
// kernel: tpu_custom_call.1
$region0: #{tpu_custom_call.1}
  #allocation0 [shape = 'u32[]', space=smem, size = 0x4, offset = 0x4, fixed_abs, tag = 'smem constant byte address 0x4 - core index']
  #allocation1 [shape = 'u32[72,128]{1,0:T(1,128)}', space=vmem, size = 0x9000, scoped, tag = 'internal scratch']
  %s0 = inlined_call_operand.vmem [shape: bf16[2,32,8], index: 0, kind: input, shape index: {}]
  %s1 = inlined_call_operand.vmem [shape: f32[2,8,8], index: 1, kind: input, shape index: {}]
  %s2 = inlined_call_operand.vmem [shape: bf16[384,32], index: 2, kind: input, shape index: {}]
  %s3 = inlined_call_operand.vmem [shape: f32[384,1], index: 3, kind: input, shape index: {}]
  %s4 = inlined_call_operand.vmem [shape: bf16[32,128], index: 4, kind: input, shape index: {}]
  %s5 = inlined_call_operand.vmem [shape: f32[32,1], index: 5, kind: input, shape index: {}]
  %s6 = inlined_call_operand.hbm [shape: f32[2,8,32], index: 6, kind: output, shape index: {}]
  %s7 = sld [smem:[#allocation0]]
  $region57: #{tpu_custom_call.1} parent=0
    _
  %s9 = ssub.s32 1, %s7
  %s10 = scalar_select 0, %s9, %s7
  $region1: #{tpu_custom_call.1} parent=0
    #allocation2 [shape = 'u8[8192]{0}', space=vmem, size = 0x2000, scoped, tag = 'output window, operand 0']
    #allocation3 [shape = 's32[2]{0}', space=sflag, size = 0x8, scoped, tag = 'scoped memory for tpu_custom_call.1']
    %11 = vsyncpa [#allocation3], 0
    %s12 = scalar_lea.sflag [#allocation3], 1
    %13 = vsyncpa %s12, 0
    loop: start=0, step=1, limit=4
    $region2: #{tpu_custom_call.1} parent=1 // loop_pre_header
      _
    $region3: #{tpu_custom_call.1} parent=1 // loop_header
      %s15 = sphi 0, %s19
      %p16 = scmp.ge.s32.totalorder %s15, 4
      %s25 = sphi 0, %s27
      %s28 = sphi 0, %s25
      %s29 = sphi 0, %s28
      %s45 = sphi 0, %s29
      %s51 = sphi 0, %s53
      %s54 = sphi 0, %s51
      %s55 = sphi 0, %s54
      %s71 = sphi 0, %s55
      %s75 = sphi 0, %s75
      %s77 = sphi 0, %s75
      %s78 = sphi 0, %s77
      %s92 = sphi 0, %s78
      %s96 = sphi 0, %s96
      %s98 = sphi 0, %s96
      %s99 = sphi 0, %s98
      %s113 = sphi 0, %s99
      %s117 = sphi 0, %s117
      %s119 = sphi 0, %s117
      %s120 = sphi 0, %s119
      %s134 = sphi 0, %s120
      %s138 = sphi 0, %s138
      %s140 = sphi 0, %s138
      %s141 = sphi 0, %s140
      %s155 = sphi 0, %s141
      %s161 = sphi 0, %s163
      %s164 = sphi 0, %s161
      %s165 = sphi 0, %s164
      %s181 = sphi 0, %s165
    $region4: #{tpu_custom_call.1} parent=1 // loop_header_branch
      %18 = sbr.rel (%p16) target = $region8
    $region5: #{tpu_custom_call.1} parent=1 // loop_body
      %s20 = ssub.s32 %s15, 1
      %s21 = ssub.s32 %s15, 2
      %s22 = sadd.s32 %s15, 1
      %s23 = ssub.s32 %s15, %s22
      %p24 = scmp.eq.s32.totalorder %s23, 0
      %s26 = sadd.s32 %s25, 1
      %s27 = scalar_select %p24, %s25, %s26
      %p30 = pneg %p24
      %p31 = scmp.eq.s32.totalorder %s15, 1
      %p32 = por %p30, %p31
      %p33 = scmp.ne.s32.totalorder %s25, %s28
      %p34 = scmp.eq.s32.totalorder %s15, 0
      %p35 = por %p33, %p34
      %p36 = scmp.ne.s32.totalorder %s25, %s28
      %p37 = scmp.eq.s32.totalorder %s20, 1
      %p38 = por %p36, %p37
      %p39 = scmp.ne.s32.totalorder %s28, %s29
      %p40 = scmp.eq.s32.totalorder %s20, 0
      %p41 = por %p39, %p40
      %p42 = scmp.ne.s32.totalorder %s28, %s29
      %p43 = scmp.eq.s32.totalorder %s21, 1
      %p44 = por %p42, %p43
      %p46 = scmp.ne.s32.totalorder %s29, %s45
      %p47 = scmp.eq.s32.totalorder %s21, 0
      %p48 = por %p46, %p47
      %s49 = ssub.s32 %s15, %s22
      %p50 = scmp.eq.s32.totalorder %s49, 0
      %s52 = sadd.s32 %s51, 1
      %s53 = scalar_select %p50, %s51, %s52
      %p56 = pneg %p50
      %p57 = scmp.eq.s32.totalorder %s15, 1
      %p58 = por %p56, %p57
      %p59 = scmp.ne.s32.totalorder %s51, %s54
      %p60 = scmp.eq.s32.totalorder %s15, 0
      %p61 = por %p59, %p60
      %p62 = scmp.ne.s32.totalorder %s51, %s54
      %p63 = scmp.eq.s32.totalorder %s20, 1
      %p64 = por %p62, %p63
      %p65 = scmp.ne.s32.totalorder %s54, %s55
      %p66 = scmp.eq.s32.totalorder %s20, 0
      %p67 = por %p65, %p66
      %p68 = scmp.ne.s32.totalorder %s54, %s55
      %p69 = scmp.eq.s32.totalorder %s21, 1
      %p70 = por %p68, %p69
      %p72 = scmp.ne.s32.totalorder %s55, %s71
      %p73 = scmp.eq.s32.totalorder %s21, 0
      %p74 = por %p72, %p73
      %s76 = sadd.s32 %s75, 1
      %p79 = scmp.eq.s32.totalorder %s15, 1
      %p80 = scmp.ne.s32.totalorder %s75, %s77
      %p81 = scmp.eq.s32.totalorder %s15, 0
      %p82 = por %p80, %p81
      %p83 = scmp.ne.s32.totalorder %s75, %s77
      %p84 = scmp.eq.s32.totalorder %s20, 1
      %p85 = por %p83, %p84
      %p86 = scmp.ne.s32.totalorder %s77, %s78
      %p87 = scmp.eq.s32.totalorder %s20, 0
      %p88 = por %p86, %p87
      %p89 = scmp.ne.s32.totalorder %s77, %s78
      %p90 = scmp.eq.s32.totalorder %s21, 1
      %p91 = por %p89, %p90
      %p93 = scmp.ne.s32.totalorder %s78, %s92
      %p94 = scmp.eq.s32.totalorder %s21, 0
      %p95 = por %p93, %p94
      %s97 = sadd.s32 %s96, 1
      %p100 = scmp.eq.s32.totalorder %s15, 1
      %p101 = scmp.ne.s32.totalorder %s96, %s98
      %p102 = scmp.eq.s32.totalorder %s15, 0
      %p103 = por %p101, %p102
      %p104 = scmp.ne.s32.totalorder %s96, %s98
      %p105 = scmp.eq.s32.totalorder %s20, 1
      %p106 = por %p104, %p105
      %p107 = scmp.ne.s32.totalorder %s98, %s99
      %p108 = scmp.eq.s32.totalorder %s20, 0
      %p109 = por %p107, %p108
      %p110 = scmp.ne.s32.totalorder %s98, %s99
      %p111 = scmp.eq.s32.totalorder %s21, 1
      %p112 = por %p110, %p111
      %p114 = scmp.ne.s32.totalorder %s99, %s113
      %p115 = scmp.eq.s32.totalorder %s21, 0
      %p116 = por %p114, %p115
      %s118 = sadd.s32 %s117, 1
      %p121 = scmp.eq.s32.totalorder %s15, 1
      %p122 = scmp.ne.s32.totalorder %s117, %s119
      %p123 = scmp.eq.s32.totalorder %s15, 0
      %p124 = por %p122, %p123
      %p125 = scmp.ne.s32.totalorder %s117, %s119
      %p126 = scmp.eq.s32.totalorder %s20, 1
      %p127 = por %p125, %p126
      %p128 = scmp.ne.s32.totalorder %s119, %s120
      %p129 = scmp.eq.s32.totalorder %s20, 0
      %p130 = por %p128, %p129
      %p131 = scmp.ne.s32.totalorder %s119, %s120
      %p132 = scmp.eq.s32.totalorder %s21, 1
      %p133 = por %p131, %p132
      %p135 = scmp.ne.s32.totalorder %s120, %s134
      %p136 = scmp.eq.s32.totalorder %s21, 0
      %p137 = por %p135, %p136
      %s139 = sadd.s32 %s138, 1
      %p142 = scmp.eq.s32.totalorder %s15, 1
      %p143 = scmp.ne.s32.totalorder %s138, %s140
      %p144 = scmp.eq.s32.totalorder %s15, 0
      %p145 = por %p143, %p144
      %p146 = scmp.ne.s32.totalorder %s138, %s140
      %p147 = scmp.eq.s32.totalorder %s20, 1
      %p148 = por %p146, %p147
      %p149 = scmp.ne.s32.totalorder %s140, %s141
      %p150 = scmp.eq.s32.totalorder %s20, 0
      %p151 = por %p149, %p150
      %p152 = scmp.ne.s32.totalorder %s140, %s141
      %p153 = scmp.eq.s32.totalorder %s21, 1
      %p154 = por %p152, %p153
      %p156 = scmp.ne.s32.totalorder %s141, %s155
      %p157 = scmp.eq.s32.totalorder %s21, 0
      %p158 = por %p156, %p157
      %s159 = ssub.s32 %s15, %s22
      %p160 = scmp.eq.s32.totalorder %s159, 0
      %s162 = sadd.s32 %s161, 1
      %s163 = scalar_select %p160, %s161, %s162
      %p166 = pneg %p160
      %p167 = scmp.eq.s32.totalorder %s15, 1
      %p168 = por %p166, %p167
      %p169 = scmp.ne.s32.totalorder %s161, %s164
      %p170 = scmp.eq.s32.totalorder %s15, 0
      %p171 = por %p169, %p170
      %p172 = scmp.ne.s32.totalorder %s161, %s164
      %p173 = scmp.eq.s32.totalorder %s20, 1
      %p174 = por %p172, %p173
      %p175 = scmp.ne.s32.totalorder %s164, %s165
      %p176 = scmp.eq.s32.totalorder %s20, 0
      %p177 = por %p175, %p176
      %p178 = scmp.ne.s32.totalorder %s164, %s165
      %p179 = scmp.eq.s32.totalorder %s21, 1
      %p180 = por %p178, %p179
      %p182 = scmp.ne.s32.totalorder %s165, %s181
      %p183 = scmp.eq.s32.totalorder %s21, 0
      %p184 = por %p182, %p183
      %p185 = scmp.le.s32.totalorder 1, %s15
      %p186 = scmp.lt.s32.totalorder %s15, 3
      %p187 = pnand %p185, %p186
      %p188 = pneg %p187
      // Predicated region
      $region9: #{tpu_custom_call.1} parent=5 // pred_check
        _
      $region10: #{tpu_custom_call.1} parent=5 // pred_check_branch
        %190 = sbr.rel (%p187) target = $region12
      $region11: #{tpu_custom_call.1} parent=5 // pred_region
        %s191 = ssub.s32 %s15, 1
        // Predicated region
        $region13: #{tpu_custom_call.1} parent=11 // pred_check
          %p192 = pneg %p88
        $region14: #{tpu_custom_call.1} parent=11 // pred_check_branch
          %194 = sbr.rel (%p192) target = $region16
        $region15: #{tpu_custom_call.1} parent=11 // pred_region
          _
        $region16: #{tpu_custom_call.1} parent=11 // pred_fallthru
          _
        // Predicated region
        $region17: #{tpu_custom_call.1} parent=11 // pred_check
          %p195 = pneg %p109
        $region18: #{tpu_custom_call.1} parent=11 // pred_check_branch
          %197 = sbr.rel (%p195) target = $region20
        $region19: #{tpu_custom_call.1} parent=11 // pred_region
          _
        $region20: #{tpu_custom_call.1} parent=11 // pred_fallthru
          _
        // Predicated region
        $region21: #{tpu_custom_call.1} parent=11 // pred_check
          %p198 = pneg %p130
        $region22: #{tpu_custom_call.1} parent=11 // pred_check_branch
          %200 = sbr.rel (%p198) target = $region24
        $region23: #{tpu_custom_call.1} parent=11 // pred_region
          _
        $region24: #{tpu_custom_call.1} parent=11 // pred_fallthru
          _
        // Predicated region
        $region25: #{tpu_custom_call.1} parent=11 // pred_check
          %p201 = pneg %p151
        $region26: #{tpu_custom_call.1} parent=11 // pred_check_branch
          %203 = sbr.rel (%p201) target = $region28
        $region27: #{tpu_custom_call.1} parent=11 // pred_region
          _
        $region28: #{tpu_custom_call.1} parent=11 // pred_fallthru
          _
      $region12: #{tpu_custom_call.1} parent=5 // pred_fallthru
        _
      %p204 = scmp.lt.s32.totalorder %s15, 2
      // Predicated region
      $region29: #{tpu_custom_call.1} parent=5 // pred_check
        %p205 = pneg %p204
      $region30: #{tpu_custom_call.1} parent=5 // pred_check_branch
        %207 = sbr.rel (%p205) target = $region32
      $region31: #{tpu_custom_call.1} parent=5 // pred_region
        // Predicated region
        $region33: #{tpu_custom_call.1} parent=31 // pred_check
          %p208 = pneg %p35
        $region34: #{tpu_custom_call.1} parent=31 // pred_check_branch
          %210 = sbr.rel (%p208) target = $region36
        $region35: #{tpu_custom_call.1} parent=31 // pred_region
          %p211 = scmp.lt.s32.totalorder %s15, 1
          %s212 = scalar_select %p211, %s15, 1
          %s213 = smul.addr %s212, 4
          %s214 = smul.addr %s213, 4
          %s215 = scalar_lea.vmem %s0, %s214
        $region36: #{tpu_custom_call.1} parent=31 // pred_fallthru
          _
        // Predicated region
        $region37: #{tpu_custom_call.1} parent=31 // pred_check
          %p216 = pneg %p61
        $region38: #{tpu_custom_call.1} parent=31 // pred_check_branch
          %218 = sbr.rel (%p216) target = $region40
        $region39: #{tpu_custom_call.1} parent=31 // pred_region
          %p219 = scmp.lt.s32.totalorder %s15, 1
          %s220 = scalar_select %p219, %s15, 1
          %s221 = smul.addr %s220, 8
          %s222 = scalar_lea.vmem %s1, %s221
        $region40: #{tpu_custom_call.1} parent=31 // pred_fallthru
          _
      $region32: #{tpu_custom_call.1} parent=5 // pred_fallthru
        _
      %p223 = scmp.le.s32.totalorder 1, %s15
      %p224 = scmp.lt.s32.totalorder %s15, 3
      %p225 = pnand %p223, %p224
      %p226 = pneg %p225
      // Predicated region
      $region41: #{tpu_custom_call.1} parent=5 // pred_check
        _
      $region42: #{tpu_custom_call.1} parent=5 // pred_check_branch
        %228 = sbr.rel (%p225) target = $region44
      $region43: #{tpu_custom_call.1} parent=5 // pred_region
        %s229 = ssub.s32 %s15, 1
        %p230 = scmp.lt.s32.totalorder %s20, 1
        %s231 = scalar_select %p230, %s20, 1
        %s232 = smul.addr %s231, 4
        %s233 = smul.addr %s232, 4
        %s234 = scalar_lea.vmem %s0, %s233
        %p235 = pneg %p41
        %p236 = pneg %p38
        %p237 = scmp.lt.s32.totalorder %s20, 1
        %s238 = scalar_select %p237, %s20, 1
        %s239 = smul.addr %s238, 8
        %s240 = scalar_lea.vmem %s1, %s239
        %p241 = pneg %p67
        %p242 = pneg %p64
        %p243 = pneg %p88
        %p244 = pneg %p85
        %p245 = pneg %p109
        %p246 = pneg %p106
        %p247 = pneg %p130
        %p248 = pneg %p127
        %p249 = pneg %p151
        %p250 = pneg %p148
        %p251 = pneg %p177
        %p252 = pneg %p174
        %s253 = sand.u32 %s164, 1
        %s254 = scalar_lea.sflag [#allocation3], %s253
        %s255 = sand.u32 %s164, 1
        %s256 = smul.addr %s255, 8
        %s257 = scalar_lea.vmem [#allocation2], %s256
        %p258 = scmp.lt.s32.totalorder %s20, 1
        %s259 = scalar_select %p258, %s20, 1
        %s260 = smul.addr %s259, 4
        %s261 = smul.addr %s260, 4
        %s262 = scalar_lea.vmem %s0, %s261
        %p263 = scmp.lt.s32.totalorder %s20, 1
        %s264 = scalar_select %p263, %s20, 1
        %s265 = smul.addr %s264, 8
        %s266 = scalar_lea.vmem %s1, %s265
        %v268 = vld [vmem:[%s262] sm:$0xf]
        %v269 = vld [vmem:[%s262 + $0x4] sm:$0xf]
        %v270 = vld [vmem:[%s262 + $0x8] sm:$0xf]
        %v271 = vld [vmem:[%s262 + $0xc] sm:$0xf]
        %v272 = vld [vmem:[%s266] sm:$0xff]
        %v273 = vld [vmem:[%s2] sm:$0xf]
        %v274 = vld [vmem:[%s2 + $0x4] sm:$0xf]
        %v275 = vld [vmem:[%s2 + $0x8] sm:$0xf]
        %v276 = vld [vmem:[%s2 + $0xc] sm:$0xf]
        %v277 = vld [vmem:[%s2 + $0x10] sm:$0xf]
        %v278 = vld [vmem:[%s2 + $0x14] sm:$0xf]
        %v279 = vld [vmem:[%s2 + $0x18] sm:$0xf]
        %v280 = vld [vmem:[%s2 + $0x1c] sm:$0xf]
        %v281 = vld [vmem:[%s2 + $0x20] sm:$0xf]
        %v282 = vld [vmem:[%s2 + $0x24] sm:$0xf]
        %v283 = vld [vmem:[%s2 + $0x28] sm:$0xf]
        %v284 = vld [vmem:[%s2 + $0x2c] sm:$0xf]
        %v285 = vld [vmem:[%s2 + $0x30] sm:$0xf]
        %v286 = vld [vmem:[%s2 + $0x34] sm:$0xf]
        %v287 = vld [vmem:[%s2 + $0x38] sm:$0xf]
        %v288 = vld [vmem:[%s2 + $0x3c] sm:$0xf]
        %v289 = vld [vmem:[%s2 + $0x40] sm:$0xf]
        %v290 = vld [vmem:[%s2 + $0x44] sm:$0xf]
        %v291 = vld [vmem:[%s2 + $0x48] sm:$0xf]
        %v292 = vld [vmem:[%s2 + $0x4c] sm:$0xf]
        %v293 = vld [vmem:[%s2 + $0x50] sm:$0xf]
        %v294 = vld [vmem:[%s2 + $0x54] sm:$0xf]
        %v295 = vld [vmem:[%s2 + $0x58] sm:$0xf]
        %v296 = vld [vmem:[%s2 + $0x5c] sm:$0xf]
        %v297 = vld [vmem:[%s2 + $0x60] sm:$0xf]
        %v298 = vld [vmem:[%s2 + $0x64] sm:$0xf]
        %v299 = vld [vmem:[%s2 + $0x68] sm:$0xf]
        %v300 = vld [vmem:[%s2 + $0x6c] sm:$0xf]
        %v301 = vld [vmem:[%s2 + $0x70] sm:$0xf]
        %v302 = vld [vmem:[%s2 + $0x74] sm:$0xf]
        %v303 = vld [vmem:[%s2 + $0x78] sm:$0xf]
        %v304 = vld [vmem:[%s2 + $0x7c] sm:$0xf]
        %v305 = vld [vmem:[%s2 + $0x80] sm:$0xf]
        %v306 = vld [vmem:[%s2 + $0x84] sm:$0xf]
        %v307 = vld [vmem:[%s2 + $0x88] sm:$0xf]
        %v308 = vld [vmem:[%s2 + $0x8c] sm:$0xf]
        %v309 = vld [vmem:[%s2 + $0x90] sm:$0xf]
        %v310 = vld [vmem:[%s2 + $0x94] sm:$0xf]
        %v311 = vld [vmem:[%s2 + $0x98] sm:$0xf]
        %v312 = vld [vmem:[%s2 + $0x9c] sm:$0xf]
        %v313 = vld [vmem:[%s2 + $0xa0] sm:$0xf]
        %v314 = vld [vmem:[%s2 + $0xa4] sm:$0xf]
        %v315 = vld [vmem:[%s2 + $0xa8] sm:$0xf]
        %v316 = vld [vmem:[%s2 + $0xac] sm:$0xf]
        %v317 = vld [vmem:[%s2 + $0xb0] sm:$0xf]
        %v318 = vld [vmem:[%s2 + $0xb4] sm:$0xf]
        %v319 = vld [vmem:[%s2 + $0xb8] sm:$0xf]
        %v320 = vld [vmem:[%s2 + $0xbc] sm:$0xf]
        %v321 = vld [vmem:[%s3] sm:$0xff]
        %v322 = vld [vmem:[%s3 + $0x8] sm:$0xff]
        %v323 = vld [vmem:[%s3 + $0x10] sm:$0xff]
        %v324 = vld [vmem:[%s3 + $0x18] sm:$0xff]
        %v325 = vld [vmem:[%s3 + $0x20] sm:$0xff]
        %v326 = vld [vmem:[%s3 + $0x28] sm:$0xff]
        %v327 = vld [vmem:[%s3 + $0x30] sm:$0xff]
        %v328 = vld [vmem:[%s3 + $0x38] sm:$0xff]
        %v329 = vld [vmem:[%s3 + $0x40] sm:$0xff]
        %v330 = vld [vmem:[%s3 + $0x48] sm:$0xff]
        %v331 = vld [vmem:[%s3 + $0x50] sm:$0xff]
        %v332 = vld [vmem:[%s3 + $0x58] sm:$0xff]
        %v333 = vld [vmem:[%s3 + $0x60] sm:$0xff]
        %v334 = vld [vmem:[%s3 + $0x68] sm:$0xff]
        %v335 = vld [vmem:[%s3 + $0x70] sm:$0xff]
        %v336 = vld [vmem:[%s3 + $0x78] sm:$0xff]
        %v337 = vld [vmem:[%s3 + $0x80] sm:$0xff]
        %v338 = vld [vmem:[%s3 + $0x88] sm:$0xff]
        %v339 = vld [vmem:[%s3 + $0x90] sm:$0xff]
        %v340 = vld [vmem:[%s3 + $0x98] sm:$0xff]
        %v341 = vld [vmem:[%s3 + $0xa0] sm:$0xff]
        %v342 = vld [vmem:[%s3 + $0xa8] sm:$0xff]
        %v343 = vld [vmem:[%s3 + $0xb0] sm:$0xff]
        %v344 = vld [vmem:[%s3 + $0xb8] sm:$0xff]
        %v345 = vld [vmem:[%s3 + $0xc0] sm:$0xff]
        %v346 = vld [vmem:[%s3 + $0xc8] sm:$0xff]
        %v347 = vld [vmem:[%s3 + $0xd0] sm:$0xff]
        %v348 = vld [vmem:[%s3 + $0xd8] sm:$0xff]
        %v349 = vld [vmem:[%s3 + $0xe0] sm:$0xff]
        %v350 = vld [vmem:[%s3 + $0xe8] sm:$0xff]
        %v351 = vld [vmem:[%s3 + $0xf0] sm:$0xff]
        %v352 = vld [vmem:[%s3 + $0xf8] sm:$0xff]
        %v353 = vld [vmem:[%s3 + $0x100] sm:$0xff]
        %v354 = vld [vmem:[%s3 + $0x108] sm:$0xff]
        %v355 = vld [vmem:[%s3 + $0x110] sm:$0xff]
        %v356 = vld [vmem:[%s3 + $0x118] sm:$0xff]
        %v357 = vld [vmem:[%s3 + $0x120] sm:$0xff]
        %v358 = vld [vmem:[%s3 + $0x128] sm:$0xff]
        %v359 = vld [vmem:[%s3 + $0x130] sm:$0xff]
        %v360 = vld [vmem:[%s3 + $0x138] sm:$0xff]
        %v361 = vld [vmem:[%s3 + $0x140] sm:$0xff]
        %v362 = vld [vmem:[%s3 + $0x148] sm:$0xff]
        %v363 = vld [vmem:[%s3 + $0x150] sm:$0xff]
        %v364 = vld [vmem:[%s3 + $0x158] sm:$0xff]
        %v365 = vld [vmem:[%s3 + $0x160] sm:$0xff]
        %v366 = vld [vmem:[%s3 + $0x168] sm:$0xff]
        %v367 = vld [vmem:[%s3 + $0x170] sm:$0xff]
        %v368 = vld [vmem:[%s3 + $0x178] sm:$0xff]
        %370 = vset.pattern.permute.xlu0 0
        %371 = vperm.xlu0 %370, %v321
        %v372 = vpop.permute.xlu0 %371
        %375 = vset.pattern.permute.xlu0 0
        %376 = vperm.xlu0 %375, %v322
        %v377 = vpop.permute.xlu0 %376
        %380 = vset.pattern.permute.xlu0 0
        %381 = vperm.xlu0 %380, %v323
        %v382 = vpop.permute.xlu0 %381
        %385 = vset.pattern.permute.xlu0 0
        %386 = vperm.xlu0 %385, %v324
        %v387 = vpop.permute.xlu0 %386
        %390 = vset.pattern.permute.xlu0 0
        %391 = vperm.xlu0 %390, %v325
        %v392 = vpop.permute.xlu0 %391
        %395 = vset.pattern.permute.xlu0 0
        %396 = vperm.xlu0 %395, %v326
        %v397 = vpop.permute.xlu0 %396
        %400 = vset.pattern.permute.xlu0 0
        %401 = vperm.xlu0 %400, %v327
        %v402 = vpop.permute.xlu0 %401
        %405 = vset.pattern.permute.xlu0 0
        %406 = vperm.xlu0 %405, %v328
        %v407 = vpop.permute.xlu0 %406
        %410 = vset.pattern.permute.xlu0 0
        %411 = vperm.xlu0 %410, %v329
        %v412 = vpop.permute.xlu0 %411
        %415 = vset.pattern.permute.xlu0 0
        %416 = vperm.xlu0 %415, %v330
        %v417 = vpop.permute.xlu0 %416
        %420 = vset.pattern.permute.xlu0 0
        %421 = vperm.xlu0 %420, %v331
        %v422 = vpop.permute.xlu0 %421
        %425 = vset.pattern.permute.xlu0 0
        %426 = vperm.xlu0 %425, %v332
        %v427 = vpop.permute.xlu0 %426
        %430 = vset.pattern.permute.xlu0 0
        %431 = vperm.xlu0 %430, %v333
        %v432 = vpop.permute.xlu0 %431
        %435 = vset.pattern.permute.xlu0 0
        %436 = vperm.xlu0 %435, %v334
        %v437 = vpop.permute.xlu0 %436
        %440 = vset.pattern.permute.xlu0 0
        %441 = vperm.xlu0 %440, %v335
        %v442 = vpop.permute.xlu0 %441
        %445 = vset.pattern.permute.xlu0 0
        %446 = vperm.xlu0 %445, %v336
        %v447 = vpop.permute.xlu0 %446
        %450 = vset.pattern.permute.xlu0 0
        %451 = vperm.xlu0 %450, %v337
        %v452 = vpop.permute.xlu0 %451
        %455 = vset.pattern.permute.xlu0 0
        %456 = vperm.xlu0 %455, %v338
        %v457 = vpop.permute.xlu0 %456
        %460 = vset.pattern.permute.xlu0 0
        %461 = vperm.xlu0 %460, %v339
        %v462 = vpop.permute.xlu0 %461
        %465 = vset.pattern.permute.xlu0 0
        %466 = vperm.xlu0 %465, %v340
        %v467 = vpop.permute.xlu0 %466
        %470 = vset.pattern.permute.xlu0 0
        %471 = vperm.xlu0 %470, %v341
        %v472 = vpop.permute.xlu0 %471
        %475 = vset.pattern.permute.xlu0 0
        %476 = vperm.xlu0 %475, %v342
        %v477 = vpop.permute.xlu0 %476
        %480 = vset.pattern.permute.xlu0 0
        %481 = vperm.xlu0 %480, %v343
        %v482 = vpop.permute.xlu0 %481
        %485 = vset.pattern.permute.xlu0 0
        %486 = vperm.xlu0 %485, %v344
        %v487 = vpop.permute.xlu0 %486
        %490 = vset.pattern.permute.xlu0 0
        %491 = vperm.xlu0 %490, %v345
        %v492 = vpop.permute.xlu0 %491
        %495 = vset.pattern.permute.xlu0 0
        %496 = vperm.xlu0 %495, %v346
        %v497 = vpop.permute.xlu0 %496
        %500 = vset.pattern.permute.xlu0 0
        %501 = vperm.xlu0 %500, %v347
        %v502 = vpop.permute.xlu0 %501
        %505 = vset.pattern.permute.xlu0 0
        %506 = vperm.xlu0 %505, %v348
        %v507 = vpop.permute.xlu0 %506
        %510 = vset.pattern.permute.xlu0 0
        %511 = vperm.xlu0 %510, %v349
        %v512 = vpop.permute.xlu0 %511
        %515 = vset.pattern.permute.xlu0 0
        %516 = vperm.xlu0 %515, %v350
        %v517 = vpop.permute.xlu0 %516
        %520 = vset.pattern.permute.xlu0 0
        %521 = vperm.xlu0 %520, %v351
        %v522 = vpop.permute.xlu0 %521
        %525 = vset.pattern.permute.xlu0 0
        %526 = vperm.xlu0 %525, %v352
        %v527 = vpop.permute.xlu0 %526
        %530 = vset.pattern.permute.xlu0 0
        %531 = vperm.xlu0 %530, %v353
        %v532 = vpop.permute.xlu0 %531
        %535 = vset.pattern.permute.xlu0 0
        %536 = vperm.xlu0 %535, %v354
        %v537 = vpop.permute.xlu0 %536
        %540 = vset.pattern.permute.xlu0 0
        %541 = vperm.xlu0 %540, %v355
        %v542 = vpop.permute.xlu0 %541
        %545 = vset.pattern.permute.xlu0 0
        %546 = vperm.xlu0 %545, %v356
        %v547 = vpop.permute.xlu0 %546
        %550 = vset.pattern.permute.xlu0 0
        %551 = vperm.xlu0 %550, %v357
        %v552 = vpop.permute.xlu0 %551
        %555 = vset.pattern.permute.xlu0 0
        %556 = vperm.xlu0 %555, %v358
        %v557 = vpop.permute.xlu0 %556
        %560 = vset.pattern.permute.xlu0 0
        %561 = vperm.xlu0 %560, %v359
        %v562 = vpop.permute.xlu0 %561
        %565 = vset.pattern.permute.xlu0 0
        %566 = vperm.xlu0 %565, %v360
        %v567 = vpop.permute.xlu0 %566
        %570 = vset.pattern.permute.xlu0 0
        %571 = vperm.xlu0 %570, %v361
        %v572 = vpop.permute.xlu0 %571
        %575 = vset.pattern.permute.xlu0 0
        %576 = vperm.xlu0 %575, %v362
        %v577 = vpop.permute.xlu0 %576
        %580 = vset.pattern.permute.xlu0 0
        %581 = vperm.xlu0 %580, %v363
        %v582 = vpop.permute.xlu0 %581
        %585 = vset.pattern.permute.xlu0 0
        %586 = vperm.xlu0 %585, %v364
        %v587 = vpop.permute.xlu0 %586
        %590 = vset.pattern.permute.xlu0 0
        %591 = vperm.xlu0 %590, %v365
        %v592 = vpop.permute.xlu0 %591
        %595 = vset.pattern.permute.xlu0 0
        %596 = vperm.xlu0 %595, %v366
        %v597 = vpop.permute.xlu0 %596
        %600 = vset.pattern.permute.xlu0 0
        %601 = vperm.xlu0 %600, %v367
        %v602 = vpop.permute.xlu0 %601
        %605 = vset.pattern.permute.xlu0 0
        %606 = vperm.xlu0 %605, %v368
        %v607 = vpop.permute.xlu0 %606
        %v657 = vunpack.c.l.b16 %v273
        %v658 = vunpack.c.l.b16 %v274
        %v659 = vunpack.c.l.b16 %v275
        %v660 = vunpack.c.l.b16 %v276
        %v661 = vunpack.c.l.b16 %v277
        %v662 = vunpack.c.l.b16 %v278
        %v663 = vunpack.c.l.b16 %v279
        %v664 = vunpack.c.l.b16 %v280
        %v665 = vunpack.c.l.b16 %v281
        %v666 = vunpack.c.l.b16 %v282
        %v667 = vunpack.c.l.b16 %v283
        %v668 = vunpack.c.l.b16 %v284
        %v669 = vunpack.c.l.b16 %v285
        %v670 = vunpack.c.l.b16 %v286
        %v671 = vunpack.c.l.b16 %v287
        %v672 = vunpack.c.l.b16 %v288
        %v673 = vunpack.c.l.b16 %v289
        %v674 = vunpack.c.l.b16 %v290
        %v675 = vunpack.c.l.b16 %v291
        %v676 = vunpack.c.l.b16 %v292
        %v677 = vunpack.c.l.b16 %v293
        %v678 = vunpack.c.l.b16 %v294
        %v679 = vunpack.c.l.b16 %v295
        %v680 = vunpack.c.l.b16 %v296
        %v681 = vunpack.c.l.b16 %v297
        %v682 = vunpack.c.l.b16 %v298
        %v683 = vunpack.c.l.b16 %v299
        %v684 = vunpack.c.l.b16 %v300
        %v685 = vunpack.c.l.b16 %v301
        %v686 = vunpack.c.l.b16 %v302
        %v687 = vunpack.c.l.b16 %v303
        %v688 = vunpack.c.l.b16 %v304
        %v689 = vunpack.c.l.b16 %v305
        %v690 = vunpack.c.l.b16 %v306
        %v691 = vunpack.c.l.b16 %v307
        %v692 = vunpack.c.l.b16 %v308
        %v693 = vunpack.c.l.b16 %v309
        %v694 = vunpack.c.l.b16 %v310
        %v695 = vunpack.c.l.b16 %v311
        %v696 = vunpack.c.l.b16 %v312
        %v697 = vunpack.c.l.b16 %v313
        %v698 = vunpack.c.l.b16 %v314
        %v699 = vunpack.c.l.b16 %v315
        %v700 = vunpack.c.l.b16 %v316
        %v701 = vunpack.c.l.b16 %v317
        %v702 = vunpack.c.l.b16 %v318
        %v703 = vunpack.c.l.b16 %v319
        %v704 = vunpack.c.l.b16 %v320
        %v705 = vpack.c.b16 %v658, %v657
        %v706 = vpack.c.b16 %v660, %v659
        %v707 = vpack.c.b16 %v662, %v661
        %v708 = vpack.c.b16 %v664, %v663
        %v709 = vpack.c.b16 %v666, %v665
        %v710 = vpack.c.b16 %v668, %v667
        %v711 = vpack.c.b16 %v670, %v669
        %v712 = vpack.c.b16 %v672, %v671
        %v713 = vpack.c.b16 %v674, %v673
        %v714 = vpack.c.b16 %v676, %v675
        %v715 = vpack.c.b16 %v678, %v677
        %v716 = vpack.c.b16 %v680, %v679
        %v717 = vpack.c.b16 %v682, %v681
        %v718 = vpack.c.b16 %v684, %v683
        %v719 = vpack.c.b16 %v686, %v685
        %v720 = vpack.c.b16 %v688, %v687
        %v721 = vpack.c.b16 %v690, %v689
        %v722 = vpack.c.b16 %v692, %v691
        %v723 = vpack.c.b16 %v694, %v693
        %v724 = vpack.c.b16 %v696, %v695
        %v725 = vpack.c.b16 %v698, %v697
        %v726 = vpack.c.b16 %v700, %v699
        %v727 = vpack.c.b16 %v702, %v701
        %v728 = vpack.c.b16 %v704, %v703
        %v733 = vunpack.c.l.b16 %v268
        %v734 = vunpack.c.l.b16 %v269
        %v735 = vunpack.c.l.b16 %v270
        %v736 = vunpack.c.l.b16 %v271
        %v737 = vpack.c.b16 %v734, %v733
        %v738 = vpack.c.b16 %v736, %v735
        %vm741 = vcmask 261120
        %v743 = vsel %vm741, %v705, 0
        %v746 = vsel %vm741, %v706, 0
        %v749 = vsel %vm741, %v707, 0
        %v752 = vsel %vm741, %v708, 0
        %v755 = vsel %vm741, %v709, 0
        %v758 = vsel %vm741, %v710, 0
        %v761 = vsel %vm741, %v711, 0
        %v764 = vsel %vm741, %v712, 0
        %v767 = vsel %vm741, %v713, 0
        %v770 = vsel %vm741, %v714, 0
        %v773 = vsel %vm741, %v715, 0
        %v776 = vsel %vm741, %v716, 0
        %v779 = vsel %vm741, %v717, 0
        %v782 = vsel %vm741, %v718, 0
        %v785 = vsel %vm741, %v719, 0
        %v788 = vsel %vm741, %v720, 0
        %v791 = vsel %vm741, %v721, 0
        %v794 = vsel %vm741, %v722, 0
        %v797 = vsel %vm741, %v723, 0
        %v800 = vsel %vm741, %v724, 0
        %v803 = vsel %vm741, %v725, 0
        %v806 = vsel %vm741, %v726, 0
        %v809 = vsel %vm741, %v727, 0
        %v812 = vsel %vm741, %v728, 0
        %814 = vmatpush.bf16.msra.mxu0 0
        %815 = vmatpush.bf16.msra.mxu0 0
        %816 = vmatpush.bf16.msra.mxu0 0
        %817 = vmatpush.bf16.msra.mxu0 0
        %818 = vmatpush.bf16.msra.mxu0 0
        %819 = vmatpush.bf16.msra.mxu0 0
        %820 = vmatpush.bf16.msra.mxu0 %v738
        %821 = vmatpush.bf16.msra.mxu0 %v737
        %822 = vmatmul.bf16.gmra.mxu0 %v743
        %v823 = vpop.f32.mrf.mxu0
        %v824 = vadd.f32 %v372, %v823
        %v825 = vpop.f32.mrf.mxu0
        %v826 = vadd.f32 %v377, %v825
        %827 = vmatmul.bf16.gmra.mxu0 %v746
        %v828 = vpop.f32.mrf.mxu0
        %v829 = vadd.f32 %v382, %v828
        %v830 = vpop.f32.mrf.mxu0
        %v831 = vadd.f32 %v387, %v830
        %832 = vmatmul.bf16.gmra.mxu0 %v749
        %v833 = vpop.f32.mrf.mxu0
        %v834 = vadd.f32 %v392, %v833
        %v835 = vpop.f32.mrf.mxu0
        %v836 = vadd.f32 %v397, %v835
        %837 = vmatmul.bf16.gmra.mxu0 %v752
        %v838 = vpop.f32.mrf.mxu0
        %v839 = vadd.f32 %v402, %v838
        %v840 = vpop.f32.mrf.mxu0
        %v841 = vadd.f32 %v407, %v840
        %842 = vmatmul.bf16.gmra.mxu0 %v755
        %v843 = vpop.f32.mrf.mxu0
        %v844 = vadd.f32 %v412, %v843
        %v845 = vpop.f32.mrf.mxu0
        %v846 = vadd.f32 %v417, %v845
        %847 = vmatmul.bf16.gmra.mxu0 %v758
        %v848 = vpop.f32.mrf.mxu0
        %v849 = vadd.f32 %v422, %v848
        %v850 = vpop.f32.mrf.mxu0
        %v851 = vadd.f32 %v427, %v850
        %852 = vmatmul.bf16.gmra.mxu0 %v761
        %v853 = vpop.f32.mrf.mxu0
        %v854 = vadd.f32 %v432, %v853
        %v855 = vpop.f32.mrf.mxu0
        %v856 = vadd.f32 %v437, %v855
        %857 = vmatmul.bf16.gmra.mxu0 %v764
        %v858 = vpop.f32.mrf.mxu0
        %v859 = vadd.f32 %v442, %v858
        %v860 = vpop.f32.mrf.mxu0
        %v861 = vadd.f32 %v447, %v860
        %862 = vmatmul.bf16.gmra.mxu0 %v767
        %v863 = vpop.f32.mrf.mxu0
        %v864 = vadd.f32 %v452, %v863
        %v865 = vpop.f32.mrf.mxu0
        %v866 = vadd.f32 %v457, %v865
        %867 = vmatmul.bf16.gmra.mxu0 %v770
        %v868 = vpop.f32.mrf.mxu0
        %v869 = vadd.f32 %v462, %v868
        %v870 = vpop.f32.mrf.mxu0
        %v871 = vadd.f32 %v467, %v870
        %872 = vmatmul.bf16.gmra.mxu0 %v773
        %v873 = vpop.f32.mrf.mxu0
        %v874 = vadd.f32 %v472, %v873
        %v875 = vpop.f32.mrf.mxu0
        %v876 = vadd.f32 %v477, %v875
        %877 = vmatmul.bf16.gmra.mxu0 %v776
        %v878 = vpop.f32.mrf.mxu0
        %v879 = vadd.f32 %v482, %v878
        %v880 = vpop.f32.mrf.mxu0
        %v881 = vadd.f32 %v487, %v880
        %882 = vmatmul.bf16.gmra.mxu0 %v779
        %v883 = vpop.f32.mrf.mxu0
        %v884 = vadd.f32 %v492, %v883
        %v885 = vpop.f32.mrf.mxu0
        %v886 = vadd.f32 %v497, %v885
        %887 = vmatmul.bf16.gmra.mxu0 %v782
        %v888 = vpop.f32.mrf.mxu0
        %v889 = vadd.f32 %v502, %v888
        %v890 = vpop.f32.mrf.mxu0
        %v891 = vadd.f32 %v507, %v890
        %892 = vmatmul.bf16.gmra.mxu0 %v785
        %v893 = vpop.f32.mrf.mxu0
        %v894 = vadd.f32 %v512, %v893
        %v895 = vpop.f32.mrf.mxu0
        %v896 = vadd.f32 %v517, %v895
        %897 = vmatmul.bf16.gmra.mxu0 %v788
        %v898 = vpop.f32.mrf.mxu0
        %v899 = vadd.f32 %v522, %v898
        %v900 = vpop.f32.mrf.mxu0
        %v901 = vadd.f32 %v527, %v900
        %902 = vmatmul.bf16.gmra.mxu0 %v791
        %v903 = vpop.f32.mrf.mxu0
        %v904 = vadd.f32 %v532, %v903
        %v905 = vpop.f32.mrf.mxu0
        %v906 = vadd.f32 %v537, %v905
        %907 = vmatmul.bf16.gmra.mxu0 %v794
        %v908 = vpop.f32.mrf.mxu0
        %v909 = vadd.f32 %v542, %v908
        %v910 = vpop.f32.mrf.mxu0
        %v911 = vadd.f32 %v547, %v910
        %912 = vmatmul.bf16.gmra.mxu0 %v797
        %v913 = vpop.f32.mrf.mxu0
        %v914 = vadd.f32 %v552, %v913
        %v915 = vpop.f32.mrf.mxu0
        %v916 = vadd.f32 %v557, %v915
        %917 = vmatmul.bf16.gmra.mxu0 %v800
        %v918 = vpop.f32.mrf.mxu0
        %v919 = vadd.f32 %v562, %v918
        %v920 = vpop.f32.mrf.mxu0
        %v921 = vadd.f32 %v567, %v920
        %922 = vmatmul.bf16.gmra.mxu0 %v803
        %v923 = vpop.f32.mrf.mxu0
        %v924 = vadd.f32 %v572, %v923
        %v925 = vpop.f32.mrf.mxu0
        %v926 = vadd.f32 %v577, %v925
        %927 = vmatmul.bf16.gmra.mxu0 %v806
        %v928 = vpop.f32.mrf.mxu0
        %v929 = vadd.f32 %v582, %v928
        %v930 = vpop.f32.mrf.mxu0
        %v931 = vadd.f32 %v587, %v930
        %932 = vmatmul.bf16.gmra.mxu0 %v809
        %v933 = vpop.f32.mrf.mxu0
        %v934 = vadd.f32 %v592, %v933
        %v935 = vpop.f32.mrf.mxu0
        %v936 = vadd.f32 %v597, %v935
        %937 = vmatmul.bf16.gmra.mxu0 %v812
        %v938 = vpop.f32.mrf.mxu0
        %v939 = vadd.f32 %v602, %v938
        %v940 = vpop.f32.mrf.mxu0
        %v941 = vadd.f32 %v607, %v940
        %942 = vdwg.mxu0
        %943 = vxpose.xlu0.b32.start [1/16] %v824, 128
        %944 = vxpose.xlu0.b32.cont [2/16] %v826, 128
        %945 = vxpose.xlu0.b32.cont [3/16] %v829, 128
        %946 = vxpose.xlu0.b32.cont [4/16] %v831, 128
        %947 = vxpose.xlu0.b32.cont [5/16] 0.0, 128
        %948 = vxpose.xlu0.b32.cont [6/16] 0.0, 128
        %949 = vxpose.xlu0.b32.cont [7/16] 0.0, 128
        %950 = vxpose.xlu0.b32.cont [8/16] 0.0, 128
        %951 = vxpose.xlu0.b32.cont [9/16] 0.0, 128
        %952 = vxpose.xlu0.b32.cont [10/16] 0.0, 128
        %953 = vxpose.xlu0.b32.cont [11/16] 0.0, 128
        %954 = vxpose.xlu0.b32.cont [12/16] 0.0, 128
        %955 = vxpose.xlu0.b32.cont [13/16] 0.0, 128
        %956 = vxpose.xlu0.b32.cont [14/16] 0.0, 128
        %957 = vxpose.xlu0.b32.cont [15/16] 0.0, 128
        %958 = vxpose.xlu0.b32.end [16/16] 0.0, 128
        %v959 = vpop.trf.xlu0
        %v960 = vpop.trf.xlu0
        %v961 = vpop.trf.xlu0
        %v962 = vpop.trf.xlu0
        %v963 = vpop.trf.xlu0
        %v964 = vpop.trf.xlu0
        %v965 = vpop.trf.xlu0
        %v966 = vpop.trf.xlu0
        %v967 = vpop.trf.xlu0
        %v968 = vpop.trf.xlu0
        %v969 = vpop.trf.xlu0
        %v970 = vpop.trf.xlu0
        %v971 = vpop.trf.xlu0
        %v972 = vpop.trf.xlu0
        %v973 = vpop.trf.xlu0
        %v974 = vpop.trf.xlu0
        %975 = vxpose.xlu0.b32.start [1/16] %v834, 128
        %976 = vxpose.xlu0.b32.cont [2/16] %v836, 128
        %977 = vxpose.xlu0.b32.cont [3/16] %v839, 128
        %978 = vxpose.xlu0.b32.cont [4/16] %v841, 128
        %979 = vxpose.xlu0.b32.cont [5/16] 0.0, 128
        %980 = vxpose.xlu0.b32.cont [6/16] 0.0, 128
        %981 = vxpose.xlu0.b32.cont [7/16] 0.0, 128
        %982 = vxpose.xlu0.b32.cont [8/16] 0.0, 128
        %983 = vxpose.xlu0.b32.cont [9/16] 0.0, 128
        %984 = vxpose.xlu0.b32.cont [10/16] 0.0, 128
        %985 = vxpose.xlu0.b32.cont [11/16] 0.0, 128
        %986 = vxpose.xlu0.b32.cont [12/16] 0.0, 128
        %987 = vxpose.xlu0.b32.cont [13/16] 0.0, 128
        %988 = vxpose.xlu0.b32.cont [14/16] 0.0, 128
        %989 = vxpose.xlu0.b32.cont [15/16] 0.0, 128
        %990 = vxpose.xlu0.b32.end [16/16] 0.0, 128
        %v991 = vpop.trf.xlu0
        %v992 = vpop.trf.xlu0
        %v993 = vpop.trf.xlu0
        %v994 = vpop.trf.xlu0
        %v995 = vpop.trf.xlu0
        %v996 = vpop.trf.xlu0
        %v997 = vpop.trf.xlu0
        %v998 = vpop.trf.xlu0
        %v999 = vpop.trf.xlu0
        %v1000 = vpop.trf.xlu0
        %v1001 = vpop.trf.xlu0
        %v1002 = vpop.trf.xlu0
        %v1003 = vpop.trf.xlu0
        %v1004 = vpop.trf.xlu0
        %v1005 = vpop.trf.xlu0
        %v1006 = vpop.trf.xlu0
        %1007 = vxpose.xlu0.b32.start [1/16] %v844, 128
        %1008 = vxpose.xlu0.b32.cont [2/16] %v846, 128
        %1009 = vxpose.xlu0.b32.cont [3/16] %v849, 128
        %1010 = vxpose.xlu0.b32.cont [4/16] %v851, 128
        %1011 = vxpose.xlu0.b32.cont [5/16] 0.0, 128
        %1012 = vxpose.xlu0.b32.cont [6/16] 0.0, 128
        %1013 = vxpose.xlu0.b32.cont [7/16] 0.0, 128
        %1014 = vxpose.xlu0.b32.cont [8/16] 0.0, 128
        %1015 = vxpose.xlu0.b32.cont [9/16] 0.0, 128
        %1016 = vxpose.xlu0.b32.cont [10/16] 0.0, 128
        %1017 = vxpose.xlu0.b32.cont [11/16] 0.0, 128
        %1018 = vxpose.xlu0.b32.cont [12/16] 0.0, 128
        %1019 = vxpose.xlu0.b32.cont [13/16] 0.0, 128
        %1020 = vxpose.xlu0.b32.cont [14/16] 0.0, 128
        %1021 = vxpose.xlu0.b32.cont [15/16] 0.0, 128
        %1022 = vxpose.xlu0.b32.end [16/16] 0.0, 128
        %v1023 = vpop.trf.xlu0
        %v1024 = vpop.trf.xlu0
        %v1025 = vpop.trf.xlu0
        %v1026 = vpop.trf.xlu0
        %v1027 = vpop.trf.xlu0
        %v1028 = vpop.trf.xlu0
        %v1029 = vpop.trf.xlu0
        %v1030 = vpop.trf.xlu0
        %v1031 = vpop.trf.xlu0
        %v1032 = vpop.trf.xlu0
        %v1033 = vpop.trf.xlu0
        %v1034 = vpop.trf.xlu0
        %v1035 = vpop.trf.xlu0
        %v1036 = vpop.trf.xlu0
        %v1037 = vpop.trf.xlu0
        %v1038 = vpop.trf.xlu0
        %1039 = vxpose.xlu0.b32.start [1/16] %v854, 128
        %1040 = vxpose.xlu0.b32.cont [2/16] %v856, 128
        %1041 = vxpose.xlu0.b32.cont [3/16] %v859, 128
        %1042 = vxpose.xlu0.b32.cont [4/16] %v861, 128
        %1043 = vxpose.xlu0.b32.cont [5/16] 0.0, 128
        %1044 = vxpose.xlu0.b32.cont [6/16] 0.0, 128
        %1045 = vxpose.xlu0.b32.cont [7/16] 0.0, 128
        %1046 = vxpose.xlu0.b32.cont [8/16] 0.0, 128
        %1047 = vxpose.xlu0.b32.cont [9/16] 0.0, 128
        %1048 = vxpose.xlu0.b32.cont [10/16] 0.0, 128
        %1049 = vxpose.xlu0.b32.cont [11/16] 0.0, 128
        %1050 = vxpose.xlu0.b32.cont [12/16] 0.0, 128
        %1051 = vxpose.xlu0.b32.cont [13/16] 0.0, 128
        %1052 = vxpose.xlu0.b32.cont [14/16] 0.0, 128
        %1053 = vxpose.xlu0.b32.cont [15/16] 0.0, 128
        %1054 = vxpose.xlu0.b32.end [16/16] 0.0, 128
        %v1055 = vpop.trf.xlu0
        %v1056 = vpop.trf.xlu0
        %v1057 = vpop.trf.xlu0
        %v1058 = vpop.trf.xlu0
        %v1059 = vpop.trf.xlu0
        %v1060 = vpop.trf.xlu0
        %v1061 = vpop.trf.xlu0
        %v1062 = vpop.trf.xlu0
        %v1063 = vpop.trf.xlu0
        %v1064 = vpop.trf.xlu0
        %v1065 = vpop.trf.xlu0
        %v1066 = vpop.trf.xlu0
        %v1067 = vpop.trf.xlu0
        %v1068 = vpop.trf.xlu0
        %v1069 = vpop.trf.xlu0
        %v1070 = vpop.trf.xlu0
        %v1071 = vpack.c.bf16 %v959, %v959
        %v1072 = vpack.c.bf16 %v991, %v991
        %v1073 = vpack.c.bf16 %v1023, %v1023
        %v1074 = vpack.c.bf16 %v1055, %v1055
        %v1075 = vpack.c.bf16 %v864, %v864
        %v1076 = vpack.c.bf16 %v866, %v866
        %v1077 = vpack.c.bf16 %v869, %v869
        %v1078 = vpack.c.bf16 %v871, %v871
        %v1079 = vpack.c.bf16 %v874, %v874
        %v1080 = vpack.c.bf16 %v876, %v876
        %v1081 = vpack.c.bf16 %v879, %v879
        %v1082 = vpack.c.bf16 %v881, %v881
        %v1083 = vpack.c.bf16 %v884, %v884
        %v1084 = vpack.c.bf16 %v886, %v886
        %v1085 = vpack.c.bf16 %v889, %v889
        %v1086 = vpack.c.bf16 %v891, %v891
        %v1087 = vpack.c.bf16 %v894, %v894
        %v1088 = vpack.c.bf16 %v896, %v896
        %v1089 = vpack.c.bf16 %v899, %v899
        %v1090 = vpack.c.bf16 %v901, %v901
        %v1091 = vpack.c.bf16 %v904, %v904
        %v1092 = vpack.c.bf16 %v906, %v906
        %v1093 = vpack.c.bf16 %v909, %v909
        %v1094 = vpack.c.bf16 %v911, %v911
        %v1095 = vpack.c.bf16 %v914, %v914
        %v1096 = vpack.c.bf16 %v916, %v916
        %v1097 = vpack.c.bf16 %v919, %v919
        %v1098 = vpack.c.bf16 %v921, %v921
        %v1099 = vpack.c.bf16 %v924, %v924
        %v1100 = vpack.c.bf16 %v926, %v926
        %v1101 = vpack.c.bf16 %v929, %v929
        %v1102 = vpack.c.bf16 %v931, %v931
        %v1103 = vpack.c.bf16 %v934, %v934
        %v1104 = vpack.c.bf16 %v936, %v936
        %v1105 = vpack.c.bf16 %v939, %v939
        %v1106 = vpack.c.bf16 %v941, %v941
        %v1111 = vunpack.c.l.b16 %v1075
        %v1112 = vunpack.c.l.b16 %v1076
        %v1113 = vunpack.c.l.b16 %v1077
        %v1114 = vunpack.c.l.b16 %v1078
        %v1115 = vpack.c.b16 %v1112, %v1111
        %v1116 = vpack.c.b16 %v1114, %v1113
        %v1120 = vsel %vm741, %v1071, 0
        %1122 = vmatpush.bf16.msra.mxu0 0
        %1123 = vmatpush.bf16.msra.mxu0 0
        %1124 = vmatpush.bf16.msra.mxu0 0
        %1125 = vmatpush.bf16.msra.mxu0 0
        %1126 = vmatpush.bf16.msra.mxu0 0
        %1127 = vmatpush.bf16.msra.mxu0 0
        %1128 = vmatpush.bf16.msra.mxu0 %v1116
        %1129 = vmatpush.bf16.msra.mxu0 %v1115
        %1130 = vmatmul.bf16.gmra.mxu0 %v1120
        %v1131 = vpop.f32.mrf.mxu0
        %v1132 = vadd.f32 %v272, %v1131
        %v1133 = vpop.f32.mrf.mxu0
        %1134 = vdwg.mxu0
        %v1139 = vunpack.c.l.b16 %v1079
        %v1140 = vunpack.c.l.b16 %v1080
        %v1141 = vunpack.c.l.b16 %v1081
        %v1142 = vunpack.c.l.b16 %v1082
        %v1143 = vpack.c.b16 %v1140, %v1139
        %v1144 = vpack.c.b16 %v1142, %v1141
        %v1148 = vsel %vm741, %v1072, 0
        %1150 = vmatpush.bf16.msra.mxu0 0
        %1151 = vmatpush.bf16.msra.mxu0 0
        %1152 = vmatpush.bf16.msra.mxu0 0
        %1153 = vmatpush.bf16.msra.mxu0 0
        %1154 = vmatpush.bf16.msra.mxu0 0
        %1155 = vmatpush.bf16.msra.mxu0 0
        %1156 = vmatpush.bf16.msra.mxu0 %v1144
        %1157 = vmatpush.bf16.msra.mxu0 %v1143
        %1158 = vmatmul.bf16.gmra.mxu0 %v1148
        %v1159 = vpop.f32.mrf.mxu0
        %v1160 = vadd.f32 %v272, %v1159
        %v1161 = vpop.f32.mrf.mxu0
        %1162 = vdwg.mxu0
        %v1167 = vunpack.c.l.b16 %v1083
        %v1168 = vunpack.c.l.b16 %v1084
        %v1169 = vunpack.c.l.b16 %v1085
        %v1170 = vunpack.c.l.b16 %v1086
        %v1171 = vpack.c.b16 %v1168, %v1167
        %v1172 = vpack.c.b16 %v1170, %v1169
        %v1176 = vsel %vm741, %v1073, 0
        %1178 = vmatpush.bf16.msra.mxu0 0
        %1179 = vmatpush.bf16.msra.mxu0 0
        %1180 = vmatpush.bf16.msra.mxu0 0
        %1181 = vmatpush.bf16.msra.mxu0 0
        %1182 = vmatpush.bf16.msra.mxu0 0
        %1183 = vmatpush.bf16.msra.mxu0 0
        %1184 = vmatpush.bf16.msra.mxu0 %v1172
        %1185 = vmatpush.bf16.msra.mxu0 %v1171
        %1186 = vmatmul.bf16.gmra.mxu0 %v1176
        %v1187 = vpop.f32.mrf.mxu0
        %v1188 = vadd.f32 %v272, %v1187
        %v1189 = vpop.f32.mrf.mxu0
        %1190 = vdwg.mxu0
        %v1195 = vunpack.c.l.b16 %v1087
        %v1196 = vunpack.c.l.b16 %v1088
        %v1197 = vunpack.c.l.b16 %v1089
        %v1198 = vunpack.c.l.b16 %v1090
        %v1199 = vpack.c.b16 %v1196, %v1195
        %v1200 = vpack.c.b16 %v1198, %v1197
        %v1204 = vsel %vm741, %v1074, 0
        %1206 = vmatpush.bf16.msra.mxu0 0
        %1207 = vmatpush.bf16.msra.mxu0 0
        %1208 = vmatpush.bf16.msra.mxu0 0
        %1209 = vmatpush.bf16.msra.mxu0 0
        %1210 = vmatpush.bf16.msra.mxu0 0
        %1211 = vmatpush.bf16.msra.mxu0 0
        %1212 = vmatpush.bf16.msra.mxu0 %v1200
        %1213 = vmatpush.bf16.msra.mxu0 %v1199
        %1214 = vmatmul.bf16.gmra.mxu0 %v1204
        %v1215 = vpop.f32.mrf.mxu0
        %v1216 = vadd.f32 %v272, %v1215
        %v1217 = vpop.f32.mrf.mxu0
        %1218 = vdwg.mxu0
        %vm1219 = vcmask 64512
        %v1220 = vsel %vm1219, %v1132, -inf
        %1221 = vmax.xlane.f32.xlu0 %v1220
        %v1222 = vpop.xlane.xlu0 %1221
        %v1223 = vsel %vm1219, %v1160, -inf
        %1224 = vmax.xlane.f32.xlu0 %v1223
        %v1225 = vpop.xlane.xlu0 %1224
        %v1226 = vsel %vm1219, %v1188, -inf
        %1227 = vmax.xlane.f32.xlu0 %v1226
        %v1228 = vpop.xlane.xlu0 %1227
        %v1229 = vsel %vm1219, %v1216, -inf
        %1230 = vmax.xlane.f32.xlu0 %v1229
        %v1231 = vpop.xlane.xlu0 %1230
        %v1232 = vsub.f32 %v1132, %v1222
        %v1233 = vsub.f32 %v1160, %v1225
        %v1234 = vsub.f32 %v1188, %v1228
        %v1235 = vsub.f32 %v1216, %v1231
        %v1236 = vmul.f32 %v1232, 1.442695
        %v1237 = vpow.pop %v1236
        %v1238 = vmul.f32 %v1233, 1.442695
        %v1239 = vpow.pop %v1238
        %v1240 = vmul.f32 %v1234, 1.442695
        %v1241 = vpow.pop %v1240
        %v1242 = vmul.f32 %v1235, 1.442695
        %v1243 = vpow.pop %v1242
        %v1244 = vsel %vm1219, %v1237, 0.0
        %1245 = vadd.xlane.f32.xlu0 %v1244
        %v1246 = vpop.xlane.xlu0 %1245
        %v1247 = vsel %vm1219, %v1239, 0.0
        %1248 = vadd.xlane.f32.xlu0 %v1247
        %v1249 = vpop.xlane.xlu0 %1248
        %v1250 = vsel %vm1219, %v1241, 0.0
        %1251 = vadd.xlane.f32.xlu0 %v1250
        %v1252 = vpop.xlane.xlu0 %1251
        %v1253 = vsel %vm1219, %v1243, 0.0
        %1254 = vadd.xlane.f32.xlu0 %v1253
        %v1255 = vpop.xlane.xlu0 %1254
        %v1256 = vrcp.pop %v1246
        %v1257 = vrcp.pop %v1249
        %v1258 = vrcp.pop %v1252
        %v1259 = vrcp.pop %v1255
        %v1260 = vmul.f32 %v1237, %v1256
        %v1261 = vmul.f32 %v1239, %v1257
        %v1262 = vmul.f32 %v1241, %v1258
        %v1263 = vmul.f32 %v1243, %v1259
        %v1264 = vpack.c.bf16 %v1260, %v1260
        %v1265 = vpack.c.bf16 %v1261, %v1261
        %v1266 = vpack.c.bf16 %v1262, %v1262
        %v1267 = vpack.c.bf16 %v1263, %v1263
        %v1272 = vunpack.c.l.b16 %v1091
        %v1273 = vunpack.c.l.b16 %v1092
        %v1274 = vunpack.c.l.b16 %v1093
        %v1275 = vunpack.c.l.b16 %v1094
        %v1276 = vpack.c.b16 %v1273, %v1272
        %v1277 = vpack.c.b16 %v1275, %v1274
        %v1279 = vsel %vm1219, %v1276, 0
        %v1282 = vsel %vm1219, %v1277, 0
        %v1285 = vsel %vm1219, %v1264, 0
        %1287 = vmatpush.bf16.xpose.msra.mxu0 0
        %1288 = vmatpush.bf16.xpose.msra.mxu0 0
        %1289 = vmatpush.bf16.xpose.msra.mxu0 0
        %1290 = vmatpush.bf16.xpose.msra.mxu0 0
        %1291 = vmatpush.bf16.xpose.msra.mxu0 0
        %1292 = vmatpush.bf16.xpose.msra.mxu0 0
        %1293 = vmatpush.bf16.xpose.msra.mxu0 0
        %1294 = vmatpush.bf16.xpose.msra.mxu0 %v1285
        %1295 = vmatmul.bf16.gmra.mxu0 %v1279
        %v1296 = vpop.f32.mrf.mxu0
        %v1297 = vadd.f32 0.0, %v1296
        %v1298 = vpop.f32.mrf.mxu0
        %v1299 = vadd.f32 0.0, %v1298
        %1300 = vmatmul.bf16.gmra.mxu0 %v1282
        %v1301 = vpop.f32.mrf.mxu0
        %v1302 = vadd.f32 0.0, %v1301
        %v1303 = vpop.f32.mrf.mxu0
        %v1304 = vadd.f32 0.0, %v1303
        %1305 = vdwg.mxu0
        %v1310 = vunpack.c.l.b16 %v1095
        %v1311 = vunpack.c.l.b16 %v1096
        %v1312 = vunpack.c.l.b16 %v1097
        %v1313 = vunpack.c.l.b16 %v1098
        %v1314 = vpack.c.b16 %v1311, %v1310
        %v1315 = vpack.c.b16 %v1313, %v1312
        %v1317 = vsel %vm1219, %v1314, 0
        %v1320 = vsel %vm1219, %v1315, 0
        %v1323 = vsel %vm1219, %v1265, 0
        %1325 = vmatpush.bf16.xpose.msra.mxu0 0
        %1326 = vmatpush.bf16.xpose.msra.mxu0 0
        %1327 = vmatpush.bf16.xpose.msra.mxu0 0
        %1328 = vmatpush.bf16.xpose.msra.mxu0 0
        %1329 = vmatpush.bf16.xpose.msra.mxu0 0
        %1330 = vmatpush.bf16.xpose.msra.mxu0 0
        %1331 = vmatpush.bf16.xpose.msra.mxu0 0
        %1332 = vmatpush.bf16.xpose.msra.mxu0 %v1323
        %1333 = vmatmul.bf16.gmra.mxu0 %v1317
        %v1334 = vpop.f32.mrf.mxu0
        %v1335 = vadd.f32 0.0, %v1334
        %v1336 = vpop.f32.mrf.mxu0
        %v1337 = vadd.f32 0.0, %v1336
        %1338 = vmatmul.bf16.gmra.mxu0 %v1320
        %v1339 = vpop.f32.mrf.mxu0
        %v1340 = vadd.f32 0.0, %v1339
        %v1341 = vpop.f32.mrf.mxu0
        %v1342 = vadd.f32 0.0, %v1341
        %1343 = vdwg.mxu0
        %v1348 = vunpack.c.l.b16 %v1099
        %v1349 = vunpack.c.l.b16 %v1100
        %v1350 = vunpack.c.l.b16 %v1101
        %v1351 = vunpack.c.l.b16 %v1102
        %v1352 = vpack.c.b16 %v1349, %v1348
        %v1353 = vpack.c.b16 %v1351, %v1350
        %v1355 = vsel %vm1219, %v1352, 0
        %v1358 = vsel %vm1219, %v1353, 0
        %v1361 = vsel %vm1219, %v1266, 0
        %1363 = vmatpush.bf16.xpose.msra.mxu0 0
        %1364 = vmatpush.bf16.xpose.msra.mxu0 0
        %1365 = vmatpush.bf16.xpose.msra.mxu0 0
        %1366 = vmatpush.bf16.xpose.msra.mxu0 0
        %1367 = vmatpush.bf16.xpose.msra.mxu0 0
        %1368 = vmatpush.bf16.xpose.msra.mxu0 0
        %1369 = vmatpush.bf16.xpose.msra.mxu0 0
        %1370 = vmatpush.bf16.xpose.msra.mxu0 %v1361
        %1371 = vmatmul.bf16.gmra.mxu0 %v1355
        %v1372 = vpop.f32.mrf.mxu0
        %v1373 = vadd.f32 0.0, %v1372
        %v1374 = vpop.f32.mrf.mxu0
        %v1375 = vadd.f32 0.0, %v1374
        %1376 = vmatmul.bf16.gmra.mxu0 %v1358
        %v1377 = vpop.f32.mrf.mxu0
        %v1378 = vadd.f32 0.0, %v1377
        %v1379 = vpop.f32.mrf.mxu0
        %v1380 = vadd.f32 0.0, %v1379
        %1381 = vdwg.mxu0
        %v1386 = vunpack.c.l.b16 %v1103
        %v1387 = vunpack.c.l.b16 %v1104
        %v1388 = vunpack.c.l.b16 %v1105
        %v1389 = vunpack.c.l.b16 %v1106
        %v1390 = vpack.c.b16 %v1387, %v1386
        %v1391 = vpack.c.b16 %v1389, %v1388
        %v1393 = vsel %vm1219, %v1390, 0
        %v1396 = vsel %vm1219, %v1391, 0
        %v1399 = vsel %vm1219, %v1267, 0
        %1401 = vmatpush.bf16.xpose.msra.mxu0 0
        %1402 = vmatpush.bf16.xpose.msra.mxu0 0
        %1403 = vmatpush.bf16.xpose.msra.mxu0 0
        %1404 = vmatpush.bf16.xpose.msra.mxu0 0
        %1405 = vmatpush.bf16.xpose.msra.mxu0 0
        %1406 = vmatpush.bf16.xpose.msra.mxu0 0
        %1407 = vmatpush.bf16.xpose.msra.mxu0 0
        %1408 = vmatpush.bf16.xpose.msra.mxu0 %v1399
        %1409 = vmatmul.bf16.gmra.mxu0 %v1393
        %v1410 = vpop.f32.mrf.mxu0
        %v1411 = vadd.f32 0.0, %v1410
        %v1412 = vpop.f32.mrf.mxu0
        %v1413 = vadd.f32 0.0, %v1412
        %1414 = vmatmul.bf16.gmra.mxu0 %v1396
        %v1415 = vpop.f32.mrf.mxu0
        %v1416 = vadd.f32 0.0, %v1415
        %v1417 = vpop.f32.mrf.mxu0
        %v1418 = vadd.f32 0.0, %v1417
        %1419 = vdwg.mxu0
        %v1420 = vpack.c.bf16 %v1299, %v1297
        %v1421 = vpack.c.bf16 %v1304, %v1302
        %v1422 = vpack.c.bf16 %v1337, %v1335
        %v1423 = vpack.c.bf16 %v1342, %v1340
        %v1424 = vpack.c.bf16 %v1375, %v1373
        %v1425 = vpack.c.bf16 %v1380, %v1378
        %v1426 = vpack.c.bf16 %v1413, %v1411
        %v1427 = vpack.c.bf16 %v1418, %v1416
        %v1428 = vld [vmem:[%s4] sm:$0xf]
        %v1429 = vld [vmem:[%s4 + $0x4] sm:$0xf]
        %v1430 = vld [vmem:[%s4 + $0x8] sm:$0xf]
        %v1431 = vld [vmem:[%s4 + $0xc] sm:$0xf]
        %v1432 = vld [vmem:[%s5] sm:$0xff]
        %v1433 = vld [vmem:[%s5 + $0x8] sm:$0xff]
        %v1434 = vld [vmem:[%s5 + $0x10] sm:$0xff]
        %v1435 = vld [vmem:[%s5 + $0x18] sm:$0xff]
        %1437 = vset.pattern.permute.xlu0 0
        %1438 = vperm.xlu0 %1437, %v1432
        %v1439 = vpop.permute.xlu0 %1438
        %1442 = vset.pattern.permute.xlu0 0
        %1443 = vperm.xlu0 %1442, %v1433
        %v1444 = vpop.permute.xlu0 %1443
        %1447 = vset.pattern.permute.xlu0 0
        %1448 = vperm.xlu0 %1447, %v1434
        %v1449 = vpop.permute.xlu0 %1448
        %1452 = vset.pattern.permute.xlu0 0
        %1453 = vperm.xlu0 %1452, %v1435
        %v1454 = vpop.permute.xlu0 %1453
        %v1460 = vunpack.c.l.b16 %v1428
        %v1461 = vunpack.c.l.b16 %v1429
        %v1462 = vunpack.c.l.b16 %v1430
        %v1463 = vunpack.c.l.b16 %v1431
        %v1464 = vpack.c.b16 %v1461, %v1460
        %v1465 = vpack.c.b16 %v1463, %v1462
        %1468 = vmatpush.bf16.msra.mxu0 %v1427
        %1469 = vmatpush.bf16.msra.mxu0 %v1426
        %1470 = vmatpush.bf16.msra.mxu0 %v1425
        %1471 = vmatpush.bf16.msra.mxu0 %v1424
        %1472 = vmatpush.bf16.msra.mxu0 %v1423
        %1473 = vmatpush.bf16.msra.mxu0 %v1422
        %1474 = vmatpush.bf16.msra.mxu0 %v1421
        %1475 = vmatpush.bf16.msra.mxu0 %v1420
        %1476 = vmatmul.bf16.gmra.mxu0 %v1464
        %v1477 = vpop.f32.mrf.mxu0
        %v1478 = vadd.f32 %v1439, %v1477
        %v1479 = vpop.f32.mrf.mxu0
        %v1480 = vadd.f32 %v1444, %v1479
        %1481 = vmatmul.bf16.gmra.mxu0 %v1465
        %v1482 = vpop.f32.mrf.mxu0
        %v1483 = vadd.f32 %v1449, %v1482
        %v1484 = vpop.f32.mrf.mxu0
        %v1485 = vadd.f32 %v1454, %v1484
        %1486 = vdwg.mxu0
        %1487 = vxpose.xlu0.b32.start [1/16] %v1478, 128
        %1488 = vxpose.xlu0.b32.cont [2/16] %v1480, 128
        %1489 = vxpose.xlu0.b32.cont [3/16] %v1483, 128
        %1490 = vxpose.xlu0.b32.cont [4/16] %v1485, 128
        %1491 = vxpose.xlu0.b32.cont [5/16] 0.0, 128
        %1492 = vxpose.xlu0.b32.cont [6/16] 0.0, 128
        %1493 = vxpose.xlu0.b32.cont [7/16] 0.0, 128
        %1494 = vxpose.xlu0.b32.cont [8/16] 0.0, 128
        %1495 = vxpose.xlu0.b32.cont [9/16] 0.0, 128
        %1496 = vxpose.xlu0.b32.cont [10/16] 0.0, 128
        %1497 = vxpose.xlu0.b32.cont [11/16] 0.0, 128
        %1498 = vxpose.xlu0.b32.cont [12/16] 0.0, 128
        %1499 = vxpose.xlu0.b32.cont [13/16] 0.0, 128
        %1500 = vxpose.xlu0.b32.cont [14/16] 0.0, 128
        %1501 = vxpose.xlu0.b32.cont [15/16] 0.0, 128
        %1502 = vxpose.xlu0.b32.end [16/16] 0.0, 128
        %v1503 = vpop.trf.xlu0
        %v1504 = vpop.trf.xlu0
        %v1505 = vpop.trf.xlu0
        %v1506 = vpop.trf.xlu0
        %v1507 = vpop.trf.xlu0
        %v1508 = vpop.trf.xlu0
        %v1509 = vpop.trf.xlu0
        %v1510 = vpop.trf.xlu0
        %v1511 = vpop.trf.xlu0
        %v1512 = vpop.trf.xlu0
        %v1513 = vpop.trf.xlu0
        %v1514 = vpop.trf.xlu0
        %v1515 = vpop.trf.xlu0
        %v1516 = vpop.trf.xlu0
        %v1517 = vpop.trf.xlu0
        %v1518 = vpop.trf.xlu0
        %1519 = vst.msk [vmem:[%s257] sm:$0xff] %vm741, %v1503
        %s1520 = sand.u32 %s164, 1
        %s1521 = scalar_lea.sflag [#allocation3], %s1520
        %s1522 = sand.u32 %s164, 1
        %s1523 = smul.addr %s1522, 8
        %s1524 = scalar_lea.vmem [#allocation2], %s1523
        // Predicated region
        $region45: #{tpu_custom_call.1} parent=43 // pred_check
          %p1525 = pneg %p174
        $region46: #{tpu_custom_call.1} parent=43 // pred_check_branch
          %1527 = sbr.rel (%p1525) target = $region48
        $region47: #{tpu_custom_call.1} parent=43 // pred_region
          %1529 = vsyncadd %s1521, 0
          %s1530 = smul.addr %s20, 8
          %s1531 = scalar_lea.hbm %s6, %s1530
          %s1533 = sshll.u32 %s1524, 4
          %s1534 = int_to_ptr.vmem [resolvable:$true] %s1533
          %s1535 = sshll.u32 %s1531, 4
          %s1536 = int_to_ptr.hbm [resolvable:$true] %s1535
          %1538 = dma.vmem_to_hbm [thread:$0]  %s1534, 128, %s1536, %s1521
        $region48: #{tpu_custom_call.1} parent=43 // pred_fallthru
          _
      $region44: #{tpu_custom_call.1} parent=5 // pred_fallthru
        _
      %p1539 = scmp.le.s32.totalorder 2, %s15
      // Predicated region
      $region49: #{tpu_custom_call.1} parent=5 // pred_check
        %p1540 = pneg %p1539
      $region50: #{tpu_custom_call.1} parent=5 // pred_check_branch
        %1542 = sbr.rel (%p1540) target = $region52
      $region51: #{tpu_custom_call.1} parent=5 // pred_region
        %s1543 = ssub.s32 %s15, 2
        // Predicated region
        $region53: #{tpu_custom_call.1} parent=51 // pred_check
          %p1544 = pneg %p180
        $region54: #{tpu_custom_call.1} parent=51 // pred_check_branch
          %1546 = sbr.rel (%p1544) target = $region56
        $region55: #{tpu_custom_call.1} parent=51 // pred_region
          %s1547 = sand.u32 %s165, 1
          %s1548 = scalar_lea.sflag [#allocation3], %s1547
          %s1549 = sand.u32 %s165, 1
          %s1550 = smul.addr %s1549, 8
          %s1551 = scalar_lea.vmem [#allocation2], %s1550
          %1553 = dma.done %s1548, 128
        $region56: #{tpu_custom_call.1} parent=51 // pred_fallthru
          _
      $region52: #{tpu_custom_call.1} parent=5 // pred_fallthru
        _
    $region6: #{tpu_custom_call.1} parent=1 // loop_footer
      %s19 = sadd.s32 1, %s15
    $region7: #{tpu_custom_call.1} parent=1 // loop_footer_branch
      %14 = sbr.rel target = $region3
    $region8: #{tpu_custom_call.1} parent=1 // loop_exit
      _
    %1554 = vsyncpa [#allocation3], 1
    %s1555 = scalar_lea.sflag [#allocation3], 1
    %1556 = vsyncpa %s1555, 1

</llo_original>
